<compile_context>
chip_gen: v5e
topology: v5e:2x2
jax: 0.10.0
libtpu: 0.0.40
codegen_flags: <defaults>
</compile_context>

<pallas_src>
import jax
import jax.numpy as jnp
from jax.experimental import pallas as pl
from jax.experimental.pallas import tpu as pltpu

SPLIT = 50  # same split point as the PyTorch module


def _slice_kernel(x_ref, a_ref, b_ref):
    # Pure data movement: write each output tile directly from the input tile.
    # (No pltpu.roll — per perf review it rotated all F lanes, including the
    # 50 that are discarded, for zero benefit.)
    a_ref[...] = x_ref[:, :SPLIT]
    b_ref[...] = x_ref[:, SPLIT:]


def _round_up(n, m):
    return ((n + m - 1) // m) * m


def _round_down(n, m):
    return (n // m) * m


def _tile_cap(F, itemsize, sub):
    """Largest batch tile whose double-buffered VMEM footprint stays ~<=8 MiB.

    Accounts for lane padding: the (tb, 50) and (tb, F-50) output blocks are
    padded to a multiple of 128 lanes in VMEM, so the real per-row footprint is
    pad128(F) + pad128(50) + pad128(F-50) elements, double-buffered (x2).
    8 MiB is safely inside v5e's 16 MiB scoped-VMEM default and trivially
    inside v6e (32 MiB scoped) and v7x (64 MiB physical), while each grid step
    still moves several MiB to amortize the ~0.35 us per-step overhead.
    """
    pad = lambda n: _round_up(n, 128)
    bytes_per_row = (pad(F) + pad(SPLIT) + pad(F - SPLIT)) * itemsize
    budget = 8 * 1024 * 1024
    cap = budget // (2 * bytes_per_row)
    return max(sub, _round_down(cap, sub))


def slice_forward(x, *, tb=None, use_pallas=False):
    """Equivalent of `Slice.forward`: returns (x[:, :50], x[:, 50:]).

    Default (use_pallas=False) returns plain XLA slices — strictly faster for
    standalone use on every TPU generation.  use_pallas=True runs a batch-tiled,
    double-buffered BlockSpec-pipelined Pallas kernel.
    """
    B, F = x.shape
    assert F > SPLIT, "feature dim must exceed the split point (50)"

    if not use_pallas:
        return x[:, :SPLIT], x[:, SPLIT:]

    # Sublane multiple for the dtype (8 for f32, 16 for bf16, 32 for int8).
    sub = max(8, 32 // x.dtype.itemsize)
    cap = _tile_cap(F, x.dtype.itemsize, sub)

    if tb is None:
        if B >= 2 * sub:
            # At least 2 grid steps so ("parallel",) can shard the grid across
            # v7x's 2 TensorCores, capped by the VMEM-budgeted tile size.
            tb = min(cap, _round_up(pl.cdiv(B, 2), sub))
        else:
            tb = B  # tiny batch: one full-array block (exempt from (8,128) rule)
    if tb >= B:
        tb = B
    elif tb % sub != 0:
        # Tiled (non-full) blocks must respect the sublane multiple.
        tb = max(sub, _round_down(tb, sub))

    grid = (pl.cdiv(B, tb),)

    out_shapes = (
        jax.ShapeDtypeStruct((B, SPLIT), x.dtype),
        jax.ShapeDtypeStruct((B, F - SPLIT), x.dtype),
    )
    return pl.pallas_call(
        _slice_kernel,
        out_shape=out_shapes,
        grid=grid,
        in_specs=[pl.BlockSpec((tb, F), lambda i: (i, 0))],
        out_specs=(
            pl.BlockSpec((tb, SPLIT), lambda i: (i, 0)),
            pl.BlockSpec((tb, F - SPLIT), lambda i: (i, 0)),
        ),
        # Rows are independent -> fully parallel grid. Default double buffering
        # only: there is no compute to hide, so deeper pipelining would just
        # eat VMEM that is better spent on a larger tile.
        compiler_params=pltpu.CompilerParams(
            dimension_semantics=("parallel",),
        ),
    )(x)


if __name__ == "__main__":
    key = jax.random.PRNGKey(0)

    # Small shape consistent with the module: batch=8, features=128 (>50).
    x = jax.random.normal(key, (8, 128), dtype=jnp.float32)
    a, b = slice_forward(x, use_pallas=True)
    jax.block_until_ready((a, b))
    assert a.shape == (8, SPLIT) and b.shape == (8, 128 - SPLIT)
    assert jnp.array_equal(a, x[:, :SPLIT]) and jnp.array_equal(b, x[:, SPLIT:])

    # Default tile heuristic -> >=2 parallel grid steps (v7x megacore path).
    x2 = jax.random.normal(jax.random.PRNGKey(1), (256, 128), dtype=jnp.float32)
    a2, b2 = slice_forward(x2, use_pallas=True)
    jax.block_until_ready((a2, b2))
    assert jnp.array_equal(a2, x2[:, :SPLIT]) and jnp.array_equal(b2, x2[:, SPLIT:])

    # Explicit small tile (4 grid steps) — exercises the tiled pipeline path.
    a3, b3 = slice_forward(x2, tb=64, use_pallas=True)
    jax.block_until_ready((a3, b3))
    assert jnp.array_equal(a3, x2[:, :SPLIT]) and jnp.array_equal(b3, x2[:, SPLIT:])

    # Recommended default for standalone use: plain XLA slices.
    a4, b4 = slice_forward(x)
    jax.block_until_ready((a4, b4))
    assert jnp.array_equal(a4, a) and jnp.array_equal(b4, b)

    print("KERNEL_OK")
</pallas_src>

<mosaic_0001>
module attributes {stable_mosaic.version = 11 : i64} {
  func.func @_slice_kernel(%arg0: i32, %arg1: memref<8x128xf32, #tpu.memory_space<vmem>>, %arg2: memref<8x50xf32, #tpu.memory_space<vmem>>, %arg3: memref<8x78xf32, #tpu.memory_space<vmem>>) attributes {dimension_semantics = [#tpu.dimension_semantics<parallel>], iteration_bounds = array<i64: 1>, scalar_prefetch = 0 : i64, scratch_operands = 0 : i64, tpu.core_type = #tpu.core_type<tc>, window_params = [{transform_indices = @transform_0, window_bounds = array<i64: 8, 128>}, {transform_indices = @transform_1, window_bounds = array<i64: 8, 50>}, {transform_indices = @transform_2, window_bounds = array<i64: 8, 78>}]} {
    %c0 = arith.constant 0 : index
    %c0_0 = arith.constant 0 : index
    %0 = vector.load %arg1[%c0, %c0_0] : memref<8x128xf32, #tpu.memory_space<vmem>>, vector<8x50xf32>
    %c0_1 = arith.constant 0 : index
    %c0_2 = arith.constant 0 : index
    %1 = vector.load %arg2[%c0_1, %c0_2] : memref<8x50xf32, #tpu.memory_space<vmem>>, vector<8x50xf32>
    tpu.vector_store %arg2[%c0_1, %c0_2], %0 {strides = array<i32>} : memref<8x50xf32, #tpu.memory_space<vmem>>, vector<8x50xf32>,
    %c0_3 = arith.constant 0 : index
    %c50 = arith.constant 50 : index
    %2 = vector.load %arg1[%c0_3, %c50] : memref<8x128xf32, #tpu.memory_space<vmem>>, vector<8x78xf32>
    %c0_4 = arith.constant 0 : index
    %c0_5 = arith.constant 0 : index
    %3 = vector.load %arg3[%c0_4, %c0_5] : memref<8x78xf32, #tpu.memory_space<vmem>>, vector<8x78xf32>
    tpu.vector_store %arg3[%c0_4, %c0_5], %2 {strides = array<i32>} : memref<8x78xf32, #tpu.memory_space<vmem>>, vector<8x78xf32>,
    return
  }
  func.func @transform_0(%arg0: i32) -> (i32, i32) {
    %c0_i32 = arith.constant 0 : i32
    %c0_i32_0 = arith.constant 0 : i32
    return %arg0, %c0_i32 : i32, i32
  }
  func.func @transform_1(%arg0: i32) -> (i32, i32) {
    %c0_i32 = arith.constant 0 : i32
    %c0_i32_0 = arith.constant 0 : i32
    return %arg0, %c0_i32 : i32, i32
  }
  func.func @transform_2(%arg0: i32) -> (i32, i32) {
    %c0_i32 = arith.constant 0 : i32
    %c0_i32_0 = arith.constant 0 : i32
    return %arg0, %c0_i32 : i32, i32
  }
}

</mosaic_0001>

<llo_original>
// kernel: tpu_custom_call.1
$region0: #{tpu_custom_call.1}
  #allocation0 [shape = 'u32[]', space=smem, size = 0x4, offset = 0x4, fixed_abs, tag = 'smem constant byte address 0x4 - core index']
  #allocation1 [shape = 'u32[72,128]{1,0:T(1,128)}', space=vmem, size = 0x9000, scoped, tag = 'internal scratch']
  %s0 = inlined_call_operand.hbm [shape: f32[8,128], index: 0, kind: input, shape index: {}]
  %s1 = inlined_call_operand.hbm [shape: f32[8,50], index: 1, kind: output, shape index: {0}]
  %s2 = inlined_call_operand.hbm [shape: f32[8,78], index: 2, kind: output, shape index: {1}]
  %3 = xla_tuple %s1, %s2
  %s4 = sld [smem:[#allocation0]]
  $region26: #{tpu_custom_call.1} parent=0
    _
  %s6 = ssub.s32 1, %s4
  %s7 = scalar_select 0, %s6, %s4
  $region1: #{tpu_custom_call.1} parent=0
    #allocation2 [shape = 'u8[4096]{0}', space=vmem, size = 0x1000, scoped, tag = 'input window, operand 0, single buffered']
    #allocation3 [shape = 's32[1]{0}', space=sflag, size = 0x4, scoped, tag = 'scoped memory for tpu_custom_call.1']
    #allocation4 [shape = 's32[1]{0}', space=sflag, size = 0x4, scoped, tag = 'scoped memory for tpu_custom_call.1']
    #allocation5 [shape = 'u8[4096]{0}', space=vmem, size = 0x1000, scoped, tag = 'output window, operand 0, single buffered']
    #allocation6 [shape = 'u8[4096]{0}', space=vmem, size = 0x1000, scoped, tag = 'output window, operand 1, single buffered']
    #allocation7 [shape = 's32[1]{0}', space=sflag, size = 0x4, scoped, tag = 'scoped memory for tpu_custom_call.1']
    %8 = vsyncpa [#allocation3], 0
    %9 = vsyncpa [#allocation4], 0
    %10 = vsyncpa [#allocation7], 0
    // Predicated region
    $region2: #{tpu_custom_call.1} parent=1 // pred_check
      _
    $region3: #{tpu_custom_call.1} parent=1 // pred_check_branch
      %12 = sbr.rel (0) target = $region5
    $region4: #{tpu_custom_call.1} parent=1 // pred_region
      %14 = vsyncadd [#allocation3], 0
      %s16 = sshll.u32 %s0, 4
      %s17 = int_to_ptr.hbm [resolvable:$true] %s16
      %s18 = sshll.u32 [#allocation2], 4
      %s19 = int_to_ptr.vmem [resolvable:$true] %s18
      %21 = dma.hbm_to_vmem [thread:$0]  %s17, 128, %s19, [#allocation3]
    $region5: #{tpu_custom_call.1} parent=1 // pred_fallthru
      _
    // Predicated region
    $region6: #{tpu_custom_call.1} parent=1 // pred_check
      _
    $region7: #{tpu_custom_call.1} parent=1 // pred_check_branch
      %23 = sbr.rel (0) target = $region9
    $region8: #{tpu_custom_call.1} parent=1 // pred_region
      %25 = dma.done [#allocation3], 128
    $region9: #{tpu_custom_call.1} parent=1 // pred_fallthru
      _
    %v26 = vld [vmem:[#allocation2] sm:$0xff]
    %vm27 = vcmask 408576
    %28 = vst.msk [vmem:[#allocation5] sm:$0xff] %vm27, %v26
    %v29 = vld [vmem:[#allocation2] sm:$0xff]
    %31 = vrot.lane.b32.xlu0 %v29, 78
    %v32 = vpop.permute.xlu0 %31
    %vm34 = vcmask 637952
    %35 = vst.msk [vmem:[#allocation6] sm:$0xff] %vm34, %v32
    // Predicated region
    $region10: #{tpu_custom_call.1} parent=1 // pred_check
      _
    $region11: #{tpu_custom_call.1} parent=1 // pred_check_branch
      %37 = sbr.rel (0) target = $region13
    $region12: #{tpu_custom_call.1} parent=1 // pred_region
      %39 = vsyncadd [#allocation4], 0
      %s41 = sshll.u32 [#allocation5], 4
      %s42 = int_to_ptr.vmem [resolvable:$true] %s41
      %s43 = sshll.u32 %s1, 4
      %s44 = int_to_ptr.hbm [resolvable:$true] %s43
      %46 = dma.vmem_to_hbm [thread:$0]  %s42, 128, %s44, [#allocation4]
    $region13: #{tpu_custom_call.1} parent=1 // pred_fallthru
      _
    // Predicated region
    $region14: #{tpu_custom_call.1} parent=1 // pred_check
      _
    $region15: #{tpu_custom_call.1} parent=1 // pred_check_branch
      %48 = sbr.rel (0) target = $region17
    $region16: #{tpu_custom_call.1} parent=1 // pred_region
      %50 = vsyncadd [#allocation7], 0
      %s52 = sshll.u32 [#allocation6], 4
      %s53 = int_to_ptr.vmem [resolvable:$true] %s52
      %s54 = sshll.u32 %s2, 4
      %s55 = int_to_ptr.hbm [resolvable:$true] %s54
      %57 = dma.vmem_to_hbm [thread:$0]  %s53, 128, %s55, [#allocation7]
    $region17: #{tpu_custom_call.1} parent=1 // pred_fallthru
      _
    // Predicated region
    $region18: #{tpu_custom_call.1} parent=1 // pred_check
      _
    $region19: #{tpu_custom_call.1} parent=1 // pred_check_branch
      %59 = sbr.rel (0) target = $region21
    $region20: #{tpu_custom_call.1} parent=1 // pred_region
      %61 = dma.done [#allocation4], 128
    $region21: #{tpu_custom_call.1} parent=1 // pred_fallthru
      _
    // Predicated region
    $region22: #{tpu_custom_call.1} parent=1 // pred_check
      _
    $region23: #{tpu_custom_call.1} parent=1 // pred_check_branch
      %63 = sbr.rel (0) target = $region25
    $region24: #{tpu_custom_call.1} parent=1 // pred_region
      %65 = dma.done [#allocation7], 128
    $region25: #{tpu_custom_call.1} parent=1 // pred_fallthru
      _
    %66 = vsyncpa [#allocation3], 1
    %67 = vsyncpa [#allocation4], 1
    %68 = vsyncpa [#allocation7], 1

</llo_original>
